<compile_context>
chip_gen: v7x
topology: tpu7x:2x2x1
jax: 0.10.0
libtpu: 0.0.40
codegen_flags: <defaults>
</compile_context>

<pallas_src>
import jax
import jax.numpy as jnp
from jax.experimental import pallas as pl
from jax.experimental.pallas import tpu as pltpu

_LANES = 512  # lane-dense last dim: multiple of 128 -> full-width vst


def discriminator_forward(x):
    """Faithful forward of the PyTorch Discriminator: identity, no kernel."""
    return x


def _identity_kernel(x_ref, o_ref):
    # Pure pass-through of the current tile (vld + full-width vst).
    o_ref[...] = x_ref[...]


def _choose_tile_rows(rows, itemsize):
    # Sublane packing multiple: 8 rows for 4B dtypes, 16 for 2B, 32 for 1B.
    row_mult = max(8, 32 // itemsize)
    # ~4 MiB per tile; 2 input bufs + 2 output bufs ~= 16 MiB << 48 MiB limit.
    target = max(row_mult, (4 * 1024 * 1024) // (_LANES * itemsize))
    target = max(row_mult, (target // row_mult) * row_mult)
    if rows > target:
        return target
    if rows > 4 * row_mult:
        # Medium tensor: keep >= ~4 grid steps for DMA/compute overlap and
        # for 2-TensorCore sharding on v7x, instead of collapsing to grid=(1,).
        return max(row_mult, (rows // 4 // row_mult) * row_mult)
    # Tiny tensor: single full-extent block (legal for any row count).
    return rows


def _identity_copy_2d(x2d):
    rows, lanes = x2d.shape
    itemsize = jnp.dtype(x2d.dtype).itemsize
    tile_r = _choose_tile_rows(rows, itemsize)
    grid = (pl.cdiv(rows, tile_r),)
    return pl.pallas_call(
        _identity_kernel,
        out_shape=jax.ShapeDtypeStruct((rows, lanes), x2d.dtype),
        grid_spec=pltpu.PrefetchScalarGridSpec(
            num_scalar_prefetch=0,
            grid=grid,
            in_specs=[pl.BlockSpec((tile_r, lanes), lambda i: (i, 0))],
            out_specs=pl.BlockSpec((tile_r, lanes), lambda i: (i, 0)),
        ),
        compiler_params=pltpu.CompilerParams(
            # Rows are independent: no-op on 1-TC v5e/v6e, shards on v7x.
            dimension_semantics=("parallel",),
            # 4 x ~4 MiB double-buffers fit with ample headroom on all gens
            # (v5e scoped default is only 16 MiB, v7x physical is 64 MiB).
            vmem_limit_bytes=48 * 1024 * 1024,
        ),
    )(x2d)


@jax.jit
def discriminator_forward_pallas(x):
    """Identity forward materialized through a Pallas TPU streaming copy."""
    orig_shape = x.shape
    total = int(x.size)
    if total == 0:
        return x

    flat = x.reshape(-1)
    aligned = (total // _LANES) * _LANES

    if aligned == 0:
        # Tensor smaller than one lane-dense row: single full-extent 2D block.
        return _identity_copy_2d(flat.reshape(1, total)).reshape(orig_shape)

    head = _identity_copy_2d(flat[:aligned].reshape(-1, _LANES)).reshape(-1)
    if aligned == total:
        return head.reshape(orig_shape)
    # Sub-512-element tail handled in plain JAX (no pad + slice round trips).
    return jnp.concatenate([head, flat[aligned:]]).reshape(orig_shape)


if __name__ == "__main__":
    key = jax.random.PRNGKey(0)
    # Small NCHW input consistent with a GAN discriminator's expected input.
    x = jax.random.normal(key, (2, 4, 16, 16), dtype=jnp.float32)

    # Faithful (zero-cost) forward — the recommended production path.
    y_fast = discriminator_forward(x)
    assert y_fast is x

    # Forced materializing copy through the Pallas kernel.
    y = discriminator_forward_pallas(x)
    y = jax.block_until_ready(y)

    assert y.shape == x.shape and y.dtype == x.dtype
    assert bool(jnp.allclose(y, x)), "identity kernel mismatch"
    print("KERNEL_OK")
</pallas_src>

<mosaic_0001>
module attributes {stable_mosaic.version = 11 : i64} {
  func.func @_identity_kernel(%arg0: i32, %arg1: memref<4x512xf32, #tpu.memory_space<vmem>>, %arg2: memref<4x512xf32, #tpu.memory_space<vmem>>) attributes {dimension_semantics = [#tpu.dimension_semantics<parallel>], iteration_bounds = array<i64: 1>, scalar_prefetch = 0 : i64, scratch_operands = 0 : i64, tpu.core_type = #tpu.core_type<tc>, window_params = [{transform_indices = @transform_0, window_bounds = array<i64: 4, 512>}, {transform_indices = @transform_1, window_bounds = array<i64: 4, 512>}]} {
    %c0 = arith.constant 0 : index
    %c0_0 = arith.constant 0 : index
    %0 = vector.load %arg1[%c0, %c0_0] : memref<4x512xf32, #tpu.memory_space<vmem>>, vector<4x512xf32>
    %c0_1 = arith.constant 0 : index
    %c0_2 = arith.constant 0 : index
    %1 = vector.load %arg2[%c0_1, %c0_2] : memref<4x512xf32, #tpu.memory_space<vmem>>, vector<4x512xf32>
    tpu.vector_store %arg2[%c0_1, %c0_2], %0 {strides = array<i32>} : memref<4x512xf32, #tpu.memory_space<vmem>>, vector<4x512xf32>,
    return
  }
  func.func @transform_0(%arg0: i32) -> (i32, i32) {
    %c0_i32 = arith.constant 0 : i32
    %c0_i32_0 = arith.constant 0 : i32
    return %arg0, %c0_i32 : i32, i32
  }
  func.func @transform_1(%arg0: i32) -> (i32, i32) {
    %c0_i32 = arith.constant 0 : i32
    %c0_i32_0 = arith.constant 0 : i32
    return %arg0, %c0_i32 : i32, i32
  }
}

</mosaic_0001>

<llo_original>
// kernel: discriminator_forward_pallas.1
$region0: #{discriminator_forward_pallas.1}
  #allocation0 [shape = 'u32[]', space=smem, size = 0x4, offset = 0x4, fixed_abs, tag = 'smem constant byte address 0x4 - core index']
  #allocation1 [shape = 'u32[144,128]{1,0:T(1,128)}', space=vmem, size = 0x12000, scoped, tag = 'internal scratch']
  %s0 = inlined_call_operand.vmem [shape: f32[4,512], index: 0, kind: input, shape index: {}]
  %s1 = inlined_call_operand.vmem [shape: f32[4,512], index: 1, kind: output, shape index: {}]
  %s2 = sld [smem:[#allocation0]]
  $region14: #{discriminator_forward_pallas.1} parent=0
    _
  %s4 = ssub.s32 1, %s2
  %s5 = scalar_select 0, %s4, %s2
  // Predicated region
  $region2: #{discriminator_forward_pallas.1} parent=0 // pred_check
    _
  $region3: #{discriminator_forward_pallas.1} parent=0 // pred_check_branch
    %7 = sbr.rel (0) target = $region5
  $region4: #{discriminator_forward_pallas.1} parent=0 // pred_region
    _
  $region5: #{discriminator_forward_pallas.1} parent=0 // pred_fallthru
    _
  %v8 = vld [vmem:[%s0] sm:$0xff]
  %v9 = vld [vmem:[%s0 + $0x8] sm:$0xff]
  %10 = vst [vmem:[%s1] sm:$0xff] %v8
  %11 = vst [vmem:[%s1 + $0x8] sm:$0xff] %v9
  // Predicated region
  $region6: #{discriminator_forward_pallas.1} parent=0 // pred_check
    _
  $region7: #{discriminator_forward_pallas.1} parent=0 // pred_check_branch
    %13 = sbr.rel (0) target = $region9
  $region8: #{discriminator_forward_pallas.1} parent=0 // pred_region
    _
  $region9: #{discriminator_forward_pallas.1} parent=0 // pred_fallthru
    _
  // Predicated region
  $region10: #{discriminator_forward_pallas.1} parent=0 // pred_check
    _
  $region11: #{discriminator_forward_pallas.1} parent=0 // pred_check_branch
    %15 = sbr.rel (0) target = $region13
  $region12: #{discriminator_forward_pallas.1} parent=0 // pred_region
    _
  $region13: #{discriminator_forward_pallas.1} parent=0 // pred_fallthru
    _

</llo_original>
